<compile_context>
chip_gen: v7x
topology: tpu7x:2x2x1
jax: 0.10.0
libtpu: 0.0.40
codegen_flags: <defaults>
</compile_context>

<pallas_src>
import functools

import jax
import jax.numpy as jnp
from jax.experimental import pallas as pl
from jax.experimental.pallas import tpu as pltpu

_INV_SQRT2 = 0.7071067811865476
_MIB = 1 << 20


def _round_up(x, m):
    return ((x + m - 1) // m) * m


def _vmem_budget_bytes():
    # ~75% of physical VMEM: ~48 MiB on v7x (64 MiB/TC), ~96 MiB on v5e/v6e.
    try:
        cap = int(pltpu.get_tpu_info().vmem_capacity_bytes)
    except Exception:
        cap = 64 * _MIB  # conservative (v7x-sized) fallback
    return (cap * 3) // 4


def _pick_tile_rows(R, requested):
    """Row tile: multiple of 8, MXU-aligned when large, >=2 grid steps when possible."""
    if requested is not None:
        return max(8, _round_up(int(requested), 8))
    t = min(512, _round_up(R, 8))
    if R > 8:                                   # >= 2 row steps (v7x megacore split)
        t = min(t, _round_up(pl.cdiv(R, 2), 8))
    if t >= 256:
        t -= t % 256                            # v6e/v7x MXU M cadence
    elif t >= 128:
        t -= t % 128                            # v5e MXU M cadence
    return max(8, t)


def _estimate_vmem(tr, D, hc, xbytes, cbytes, pbytes, wbuf):
    return (2 * 2 * tr * D * xbytes             # x + out tiles, double-buffered
            + tr * D * (cbytes + 4)             # xn scratch + f32 accumulator scratch
            + wbuf * hc * (2 * D * cbytes + pbytes)   # W1/W2/b1 chunk(s)
            + 3 * D * pbytes                    # gamma / beta / b2 (single-buffered)
            + tr * hc * (4 + cbytes)            # h in f32 + compute-dtype copy
            + tr * D * 4                        # misc f32 temporaries
            + 4 * _MIB)                         # headroom for Mosaic internal scratch


def _pick_h_chunk(H, D, tr, xbytes, cbytes, pbytes, budget):
    """Largest hidden-dim chunk: resident if it fits, else a lane-aligned divisor of H."""
    full = _estimate_vmem(tr, D, H, xbytes, cbytes, pbytes, wbuf=1)
    if full <= budget:
        return H, full
    for n in range(2, max(2, H // 128) + 1):
        if H % n:
            continue
        hc = H // n
        if hc % 128:
            continue
        est = _estimate_vmem(tr, D, hc, xbytes, cbytes, pbytes, wbuf=2)
        if est <= budget:
            return hc, est
    return H, full   # no clean divisor: keep weights resident (may spill)


def _prenorm_residual_kernel(x_ref, gamma_ref, beta_ref, w1_ref, b1_ref,
                             w2_ref, b2_ref, o_ref, xn_ref, acc_ref,
                             *, eps, approx_gelu, compute_dtype):
    k = pl.program_id(1)   # hidden-dim chunk index (innermost, "arbitrary")

    @pl.when(k == 0)
    def _():
        x = x_ref[...].astype(jnp.float32)                        # (tr, D)
        inv_d = 1.0 / x.shape[-1]
        mean = jnp.sum(x, axis=-1, keepdims=True) * inv_d         # one-pass stats
        ex2 = jnp.sum(x * x, axis=-1, keepdims=True) * inv_d
        var = jnp.maximum(ex2 - mean * mean, 0.0)
        xn = (x - mean) * jax.lax.rsqrt(var + eps)
        xn = xn * gamma_ref[...].astype(jnp.float32) + beta_ref[...].astype(jnp.float32)
        xn_ref[...] = xn.astype(xn_ref.dtype)
        acc_ref[...] = jnp.zeros_like(acc_ref)

    # FeedForward on this hidden-dim chunk: Linear -> GELU -> Linear (f32 accumulate).
    h = jnp.dot(xn_ref[...], w1_ref[...], preferred_element_type=jnp.float32)
    h = h + b1_ref[...].astype(jnp.float32)
    if approx_gelu:
        h = jax.nn.gelu(h, approximate=True)                 # EUP route (v5e VALU relief)
    else:
        h = 0.5 * h * (1.0 + jax.lax.erf(h * _INV_SQRT2))     # torch.nn.GELU default
    acc_ref[...] += jnp.dot(h.astype(compute_dtype), w2_ref[...],
                            preferred_element_type=jnp.float32)

    @pl.when(k == pl.num_programs(1) - 1)
    def _():
        y = acc_ref[...] + b2_ref[...].astype(jnp.float32) \
            + x_ref[...].astype(jnp.float32)                  # residual re-read
        o_ref[...] = y.astype(o_ref.dtype)


@functools.partial(
    jax.jit,
    static_argnames=("eps", "tile_rows", "compute_dtype", "approx_gelu", "h_chunks"))
def prenorm_residual(x, gamma, beta, w1, b1, w2, b2, *, eps=1e-5,
                     tile_rows=None, compute_dtype=jnp.bfloat16,
                     approx_gelu=False, h_chunks=None):
    """x: (B, S, D) -> (B, S, D).  Fused LayerNorm + FeedForward + residual."""
    B, S, D = x.shape
    H = w1.shape[1]
    assert w1.shape == (D, H) and w2.shape == (H, D)
    R = B * S

    # Natural 1-D PyTorch parameter shapes -> 2-D (lane-major) layouts.
    gamma = jnp.asarray(gamma, jnp.float32).reshape(1, D)
    beta = jnp.asarray(beta, jnp.float32).reshape(1, D)
    b1 = jnp.asarray(b1, jnp.float32).reshape(1, H)
    b2 = jnp.asarray(b2, jnp.float32).reshape(1, D)
    # MXU compute dtype (no-op if the caller already stores bf16 weights).
    w1c = jnp.asarray(w1).astype(compute_dtype)
    w2c = jnp.asarray(w2).astype(compute_dtype)

    xbytes = jnp.dtype(x.dtype).itemsize
    cbytes = jnp.dtype(compute_dtype).itemsize
    pbytes = 4

    tr = _pick_tile_rows(R, tile_rows)
    budget = _vmem_budget_bytes()
    if (h_chunks and H % h_chunks == 0
            and (h_chunks == 1 or (H // h_chunks) % 128 == 0)):
        hc = H // h_chunks
        est = _estimate_vmem(tr, D, hc, xbytes, cbytes, pbytes,
                             wbuf=1 if h_chunks == 1 else 2)
    else:
        hc, est = _pick_h_chunk(H, D, tr, xbytes, cbytes, pbytes, budget)
    n_hc = H // hc
    vmem_limit = int(min(budget, max(32 * _MIB, est)))

    x2 = x.reshape(R, D)   # partial last row tile handled by Pallas (masked writeback)

    const = dict(pipeline_mode=pl.Buffered(1))   # grid-invariant operands: single buffer
    wkw = const if n_hc == 1 else {}             # streamed weight chunks: double buffer

    kernel = functools.partial(_prenorm_residual_kernel, eps=eps,
                               approx_gelu=approx_gelu, compute_dtype=compute_dtype)

    out = pl.pallas_call(
        kernel,
        out_shape=jax.ShapeDtypeStruct((R, D), x.dtype),
        grid_spec=pltpu.PrefetchScalarGridSpec(
            num_scalar_prefetch=0,
            grid=(pl.cdiv(R, tr), n_hc),
            in_specs=[
                pl.BlockSpec((tr, D), lambda i, k: (i, 0)),            # x rows
                pl.BlockSpec((1, D), lambda i, k: (0, 0), **const),    # gamma
                pl.BlockSpec((1, D), lambda i, k: (0, 0), **const),    # beta
                pl.BlockSpec((D, hc), lambda i, k: (0, k), **wkw),     # W1 chunk
                pl.BlockSpec((1, hc), lambda i, k: (0, k), **wkw),     # b1 chunk
                pl.BlockSpec((hc, D), lambda i, k: (k, 0), **wkw),     # W2 chunk
                pl.BlockSpec((1, D), lambda i, k: (0, 0), **const),    # b2
            ],
            out_specs=pl.BlockSpec((tr, D), lambda i, k: (i, 0)),
            scratch_shapes=[pltpu.VMEM((tr, D), compute_dtype),        # xn = LN(x)
                            pltpu.VMEM((tr, D), jnp.float32)],         # y accumulator
        ),
        compiler_params=pltpu.CompilerParams(
            dimension_semantics=("parallel", "arbitrary"),
            vmem_limit_bytes=vmem_limit),
    )(x2, gamma, beta, w1c, b1, w2c, b2)

    return out.reshape(B, S, D)


if __name__ == "__main__":
    # Small shapes, lane-aligned: D, H multiples of 128.
    B, S, D = 2, 8, 128
    H = 2 * D

    key = jax.random.PRNGKey(0)
    kx, kg, kb, k1, k2 = jax.random.split(key, 5)

    x = jax.random.normal(kx, (B, S, D), dtype=jnp.float32)
    gamma = 1.0 + 0.1 * jax.random.normal(kg, (D,), jnp.float32)
    beta = 0.1 * jax.random.normal(kb, (D,), jnp.float32)
    w1 = 0.02 * jax.random.normal(k1, (D, H), jnp.float32)
    b1 = jnp.zeros((H,), jnp.float32)
    w2 = 0.02 * jax.random.normal(k2, (H, D), jnp.float32)
    b2 = jnp.zeros((D,), jnp.float32)

    # Pure-JAX reference (f32, exact erf GELU = torch.nn.GELU default).
    def ref(xx):
        mu = jnp.mean(xx, -1, keepdims=True)
        var = jnp.mean((xx - mu) ** 2, -1, keepdims=True)
        xn = (xx - mu) * jax.lax.rsqrt(var + 1e-5) * gamma + beta
        h = jax.nn.gelu(xn @ w1 + b1, approximate=False)
        return h @ w2 + b2 + xx

    expected = ref(x)

    # Resident-weight path (default).
    out = jax.block_until_ready(prenorm_residual(x, gamma, beta, w1, b1, w2, b2))
    assert out.shape == x.shape and out.dtype == x.dtype
    err = float(jnp.max(jnp.abs(out - expected)))
    assert jnp.allclose(out, expected, atol=1e-2, rtol=1e-2), err

    # Hidden-dim streaming path (exercised explicitly at small shapes).
    out_c = jax.block_until_ready(
        prenorm_residual(x, gamma, beta, w1, b1, w2, b2, h_chunks=2))
    err_c = float(jnp.max(jnp.abs(out_c - expected)))
    assert jnp.allclose(out_c, expected, atol=1e-2, rtol=1e-2), err_c

    print("KERNEL_OK")
</pallas_src>

<mosaic_0001>
module attributes {stable_mosaic.version = 11 : i64} {
  func.func @_prenorm_residual_kernel(%arg0: i32, %arg1: i32, %arg2: memref<8x128xf32, #tpu.memory_space<vmem>>, %arg3: memref<1x128xf32, #tpu.memory_space<vmem>>, %arg4: memref<1x128xf32, #tpu.memory_space<vmem>>, %arg5: memref<128x256xbf16, #tpu.memory_space<vmem>>, %arg6: memref<1x256xf32, #tpu.memory_space<vmem>>, %arg7: memref<256x128xbf16, #tpu.memory_space<vmem>>, %arg8: memref<1x128xf32, #tpu.memory_space<vmem>>, %arg9: memref<8x128xf32, #tpu.memory_space<vmem>>, %arg10: memref<8x128xbf16, #tpu.memory_space<vmem>>, %arg11: memref<8x128xf32, #tpu.memory_space<vmem>>) attributes {dimension_semantics = [#tpu.dimension_semantics<parallel>, #tpu.dimension_semantics<arbitrary>], iteration_bounds = array<i64: 2, 1>, scalar_prefetch = 0 : i64, scratch_operands = 2 : i64, tpu.core_type = #tpu.core_type<tc>, window_params = [{transform_indices = @transform_0, window_bounds = array<i64: 8, 128>}, {pipeline_mode = #tpu.pipeline_mode<synchronous>, transform_indices = @transform_1, window_bounds = array<i64: 1, 128>}, {pipeline_mode = #tpu.pipeline_mode<synchronous>, transform_indices = @transform_2, window_bounds = array<i64: 1, 128>}, {pipeline_mode = #tpu.pipeline_mode<synchronous>, transform_indices = @transform_3, window_bounds = array<i64: 128, 256>}, {pipeline_mode = #tpu.pipeline_mode<synchronous>, transform_indices = @transform_4, window_bounds = array<i64: 1, 256>}, {pipeline_mode = #tpu.pipeline_mode<synchronous>, transform_indices = @transform_5, window_bounds = array<i64: 256, 128>}, {pipeline_mode = #tpu.pipeline_mode<synchronous>, transform_indices = @transform_6, window_bounds = array<i64: 1, 128>}, {transform_indices = @transform_7, window_bounds = array<i64: 8, 128>}]} {
    %c0_i32 = arith.constant 0 : i32
    %0 = arith.cmpi eq, %arg1, %c0_i32 : i32
    %1 = arith.extui %0 : i1 to i32
    %c0_i32_0 = arith.constant 0 : i32
    %2 = arith.cmpi ne, %1, %c0_i32_0 : i32
    scf.if %2 {
      %c0_18 = arith.constant 0 : index
      %c0_19 = arith.constant 0 : index
      %26 = vector.load %arg2[%c0_18, %c0_19] : memref<8x128xf32, #tpu.memory_space<vmem>>, vector<8x128xf32>
      %cst_20 = arith.constant dense<0.000000e+00> : vector<8xf32>
      %27 = vector.multi_reduction <add>, %26, %cst_20 [1] : vector<8x128xf32> to vector<8xf32>
      %28 = vector.shape_cast %27 : vector<8xf32> to vector<8x1xf32>
      %cst_21 = arith.constant 7.812500e-03 : f32
      %29 = vector.broadcast %cst_21 : f32 to vector<8x1xf32>
      %30 = arith.mulf %28, %29 : vector<8x1xf32>
      %31 = arith.mulf %26, %26 : vector<8x128xf32>
      %cst_22 = arith.constant dense<0.000000e+00> : vector<8xf32>
      %32 = vector.multi_reduction <add>, %31, %cst_22 [1] : vector<8x128xf32> to vector<8xf32>
      %33 = vector.shape_cast %32 : vector<8xf32> to vector<8x1xf32>
      %cst_23 = arith.constant 7.812500e-03 : f32
      %34 = vector.broadcast %cst_23 : f32 to vector<8x1xf32>
      %35 = arith.mulf %33, %34 : vector<8x1xf32>
      %36 = arith.mulf %30, %30 : vector<8x1xf32>
      %37 = arith.subf %35, %36 : vector<8x1xf32>
      %cst_24 = arith.constant 0.000000e+00 : f32
      %38 = vector.broadcast %cst_24 : f32 to vector<8x1xf32>
      %39 = arith.maximumf %37, %38 : vector<8x1xf32>
      %40 = vector.broadcast %30 : vector<8x1xf32> to vector<8x128xf32>
      %41 = arith.subf %26, %40 : vector<8x128xf32>
      %cst_25 = arith.constant 9.99999974E-6 : f32
      %42 = vector.broadcast %cst_25 : f32 to vector<8x1xf32>
      %43 = arith.addf %39, %42 : vector<8x1xf32>
      %44 = math.rsqrt %43 : vector<8x1xf32>
      %45 = vector.broadcast %44 : vector<8x1xf32> to vector<8x128xf32>
      %46 = arith.mulf %41, %45 : vector<8x128xf32>
      %c0_26 = arith.constant 0 : index
      %c0_27 = arith.constant 0 : index
      %47 = vector.load %arg3[%c0_26, %c0_27] : memref<1x128xf32, #tpu.memory_space<vmem>>, vector<1x128xf32>
      %48 = vector.broadcast %47 : vector<1x128xf32> to vector<8x128xf32>
      %49 = arith.mulf %46, %48 : vector<8x128xf32>
      %c0_28 = arith.constant 0 : index
      %c0_29 = arith.constant 0 : index
      %50 = vector.load %arg4[%c0_28, %c0_29] : memref<1x128xf32, #tpu.memory_space<vmem>>, vector<1x128xf32>
      %51 = vector.broadcast %50 : vector<1x128xf32> to vector<8x128xf32>
      %52 = arith.addf %49, %51 : vector<8x128xf32>
      %53 = arith.truncf %52 : vector<8x128xf32> to vector<8x128xbf16>
      %c0_30 = arith.constant 0 : index
      %c0_31 = arith.constant 0 : index
      %54 = vector.load %arg10[%c0_30, %c0_31] : memref<8x128xbf16, #tpu.memory_space<vmem>>, vector<8x128xbf16>
      tpu.vector_store %arg10[%c0_30, %c0_31], %53 {strides = array<i32>} : memref<8x128xbf16, #tpu.memory_space<vmem>>, vector<8x128xbf16>,
      %cst_32 = arith.constant 0.000000e+00 : f32
      %55 = vector.broadcast %cst_32 : f32 to vector<8x128xf32>
      %c0_33 = arith.constant 0 : index
      %c0_34 = arith.constant 0 : index
      %56 = vector.load %arg11[%c0_33, %c0_34] : memref<8x128xf32, #tpu.memory_space<vmem>>, vector<8x128xf32>
      tpu.vector_store %arg11[%c0_33, %c0_34], %55 {strides = array<i32>} : memref<8x128xf32, #tpu.memory_space<vmem>>, vector<8x128xf32>,
    } else {
    }
    %c0 = arith.constant 0 : index
    %c0_1 = arith.constant 0 : index
    %3 = vector.load %arg10[%c0, %c0_1] : memref<8x128xbf16, #tpu.memory_space<vmem>>, vector<8x128xbf16>
    %c0_2 = arith.constant 0 : index
    %c0_3 = arith.constant 0 : index
    %4 = vector.load %arg5[%c0_2, %c0_3] : memref<128x256xbf16, #tpu.memory_space<vmem>>, vector<128x256xbf16>
    %cst = arith.constant dense<0.000000e+00> : vector<8x256xf32>
    %5 = tpu.matmul %3, %4, %cst {dimension_numbers = #tpu.dot_dimension_numbers<[1], [0], [0], [1], [0, 0, 1, 1], [], []>} : vector<8x128xbf16>, vector<128x256xbf16>, vector<8x256xf32> -> vector<8x256xf32>
    %c0_4 = arith.constant 0 : index
    %c0_5 = arith.constant 0 : index
    %6 = vector.load %arg6[%c0_4, %c0_5] : memref<1x256xf32, #tpu.memory_space<vmem>>, vector<1x256xf32>
    %7 = vector.broadcast %6 : vector<1x256xf32> to vector<8x256xf32>
    %8 = arith.addf %5, %7 : vector<8x256xf32>
    %cst_6 = arith.constant 5.000000e-01 : f32
    %9 = vector.broadcast %cst_6 : f32 to vector<8x256xf32>
    %10 = arith.mulf %9, %8 : vector<8x256xf32>
    %cst_7 = arith.constant 0.707106769 : f32
    %11 = vector.broadcast %cst_7 : f32 to vector<8x256xf32>
    %12 = arith.mulf %8, %11 : vector<8x256xf32>
    %13 = math.erf %12 : vector<8x256xf32>
    %cst_8 = arith.constant 1.000000e+00 : f32
    %14 = vector.broadcast %cst_8 : f32 to vector<8x256xf32>
    %15 = arith.addf %14, %13 : vector<8x256xf32>
    %16 = arith.mulf %10, %15 : vector<8x256xf32>
    %c0_9 = arith.constant 0 : index
    %c0_10 = arith.constant 0 : index
    %17 = vector.load %arg11[%c0_9, %c0_10] : memref<8x128xf32, #tpu.memory_space<vmem>>, vector<8x128xf32>
    %18 = arith.truncf %16 : vector<8x256xf32> to vector<8x256xbf16>
    %c0_11 = arith.constant 0 : index
    %c0_12 = arith.constant 0 : index
    %19 = vector.load %arg7[%c0_11, %c0_12] : memref<256x128xbf16, #tpu.memory_space<vmem>>, vector<256x128xbf16>
    %cst_13 = arith.constant dense<0.000000e+00> : vector<8x128xf32>
    %20 = tpu.matmul %18, %19, %cst_13 {dimension_numbers = #tpu.dot_dimension_numbers<[1], [0], [0], [1], [0, 0, 1, 1], [], []>} : vector<8x256xbf16>, vector<256x128xbf16>, vector<8x128xf32> -> vector<8x128xf32>
    %21 = arith.addf %17, %20 : vector<8x128xf32>
    %c0_14 = arith.constant 0 : index
    %c0_15 = arith.constant 0 : index
    %22 = vector.load %arg11[%c0_14, %c0_15] : memref<8x128xf32, #tpu.memory_space<vmem>>, vector<8x128xf32>
    tpu.vector_store %arg11[%c0_14, %c0_15], %21 {strides = array<i32>} : memref<8x128xf32, #tpu.memory_space<vmem>>, vector<8x128xf32>,
    %c0_i32_16 = arith.constant 0 : i32
    %23 = arith.cmpi eq, %arg1, %c0_i32_16 : i32
    %24 = arith.extui %23 : i1 to i32
    %c0_i32_17 = arith.constant 0 : i32
    %25 = arith.cmpi ne, %24, %c0_i32_17 : i32
    scf.if %25 {
      %c0_18 = arith.constant 0 : index
      %c0_19 = arith.constant 0 : index
      %26 = vector.load %arg11[%c0_18, %c0_19] : memref<8x128xf32, #tpu.memory_space<vmem>>, vector<8x128xf32>
      %c0_20 = arith.constant 0 : index
      %c0_21 = arith.constant 0 : index
      %27 = vector.load %arg8[%c0_20, %c0_21] : memref<1x128xf32, #tpu.memory_space<vmem>>, vector<1x128xf32>
      %28 = vector.broadcast %27 : vector<1x128xf32> to vector<8x128xf32>
      %29 = arith.addf %26, %28 : vector<8x128xf32>
      %c0_22 = arith.constant 0 : index
      %c0_23 = arith.constant 0 : index
      %30 = vector.load %arg2[%c0_22, %c0_23] : memref<8x128xf32, #tpu.memory_space<vmem>>, vector<8x128xf32>
      %31 = arith.addf %29, %30 : vector<8x128xf32>
      %c0_24 = arith.constant 0 : index
      %c0_25 = arith.constant 0 : index
      %32 = vector.load %arg9[%c0_24, %c0_25] : memref<8x128xf32, #tpu.memory_space<vmem>>, vector<8x128xf32>
      tpu.vector_store %arg9[%c0_24, %c0_25], %31 {strides = array<i32>} : memref<8x128xf32, #tpu.memory_space<vmem>>, vector<8x128xf32>,
    } else {
    }
    return
  }
  func.func @transform_0(%arg0: i32, %arg1: i32) -> (i32, i32) {
    %c0_i32 = arith.constant 0 : i32
    %c0_i32_0 = arith.constant 0 : i32
    return %arg0, %c0_i32 : i32, i32
  }
  func.func @transform_1(%arg0: i32, %arg1: i32) -> (i32, i32) {
    %c0_i32 = arith.constant 0 : i32
    %c0_i32_0 = arith.constant 0 : i32
    %c0_i32_1 = arith.constant 0 : i32
    return %c0_i32, %c0_i32_0 : i32, i32
  }
  func.func @transform_2(%arg0: i32, %arg1: i32) -> (i32, i32) {
    %c0_i32 = arith.constant 0 : i32
    %c0_i32_0 = arith.constant 0 : i32
    %c0_i32_1 = arith.constant 0 : i32
    return %c0_i32, %c0_i32_0 : i32, i32
  }
  func.func @transform_3(%arg0: i32, %arg1: i32) -> (i32, i32) {
    %c0_i32 = arith.constant 0 : i32
    %c0_i32_0 = arith.constant 0 : i32
    return %c0_i32, %arg1 : i32, i32
  }
  func.func @transform_4(%arg0: i32, %arg1: i32) -> (i32, i32) {
    %c0_i32 = arith.constant 0 : i32
    %c0_i32_0 = arith.constant 0 : i32
    return %c0_i32, %arg1 : i32, i32
  }
  func.func @transform_5(%arg0: i32, %arg1: i32) -> (i32, i32) {
    %c0_i32 = arith.constant 0 : i32
    %c0_i32_0 = arith.constant 0 : i32
    return %arg1, %c0_i32 : i32, i32
  }
  func.func @transform_6(%arg0: i32, %arg1: i32) -> (i32, i32) {
    %c0_i32 = arith.constant 0 : i32
    %c0_i32_0 = arith.constant 0 : i32
    %c0_i32_1 = arith.constant 0 : i32
    return %c0_i32, %c0_i32_0 : i32, i32
  }
  func.func @transform_7(%arg0: i32, %arg1: i32) -> (i32, i32) {
    %c0_i32 = arith.constant 0 : i32
    %c0_i32_0 = arith.constant 0 : i32
    return %arg0, %c0_i32 : i32, i32
  }
}

</mosaic_0001>

<llo_original>
// kernel: prenorm_residual.1
$region0: #{prenorm_residual.1}
  #allocation0 [shape = 'u32[]', space=smem, size = 0x4, offset = 0x4, fixed_abs, tag = 'smem constant byte address 0x4 - core index']
  #allocation1 [shape = 'u32[144,128]{1,0:T(1,128)}', space=vmem, size = 0x12000, scoped, tag = 'internal scratch']
  #allocation2 [shape = 'bf16[8,128]{1,0:T(8,128)(2,1)}', space=vmem, size = 0x800, scoped, tag = 'scratch operand']
  #allocation3 [shape = 'f32[8,128]{1,0:T(8,128)}', space=vmem, size = 0x1000, scoped, tag = 'scratch operand']
  %s0 = inlined_call_operand.vmem [shape: f32[16,128], index: 0, kind: input, shape index: {}]
  %s1 = inlined_call_operand.vmem [shape: f32[1,128], index: 1, kind: input, shape index: {}]
  %s2 = inlined_call_operand.vmem [shape: f32[1,128], index: 2, kind: input, shape index: {}]
  %s3 = inlined_call_operand.vmem [shape: bf16[128,256], index: 3, kind: input, shape index: {}]
  %s4 = inlined_call_operand.vmem [shape: f32[1,256], index: 4, kind: input, shape index: {}]
  %s5 = inlined_call_operand.vmem [shape: bf16[256,128], index: 5, kind: input, shape index: {}]
  %s6 = inlined_call_operand.vmem [shape: f32[1,128], index: 6, kind: input, shape index: {}]
  %s7 = inlined_call_operand.hbm [shape: f32[16,128], index: 7, kind: output, shape index: {}]
  %s8 = sld [smem:[#allocation0]]
  $region69: #{prenorm_residual.1} parent=0
    _
  %s10 = ssub.s32 1, %s8
  %s11 = scalar_select 0, %s10, %s8
  $region1: #{prenorm_residual.1} parent=0
    #allocation4 [shape = 'u8[8192]{0}', space=vmem, size = 0x2000, scoped, tag = 'output window, operand 0']
    #allocation5 [shape = 's32[2]{0}', space=sflag, size = 0x8, scoped, tag = 'scoped memory for prenorm_residual.1']
    %12 = vsyncpa [#allocation5], 0
    %s13 = scalar_lea.sflag [#allocation5], 1
    %14 = vsyncpa %s13, 0
    loop: start=0, step=1, limit=4
    $region2: #{prenorm_residual.1} parent=1 // loop_pre_header
      _
    $region3: #{prenorm_residual.1} parent=1 // loop_header
      %s16 = sphi 0, %s20
      %p17 = scmp.ge.s32.totalorder %s16, 4
      %s23 = sphi 0, %s35
      %s24 = sphi 0, %s31
      %s25 = sphi 0, %s23
      %s26 = sphi 0, %s24
      %s27 = sphi 0, %s25
      %s28 = sphi 0, %s26
      %s38 = sphi 0, %s40
      %s41 = sphi 0, %s38
      %s42 = sphi 0, %s41
      %s58 = sphi 0, %s42
      %s62 = sphi 0, %s62
      %s64 = sphi 0, %s62
      %s65 = sphi 0, %s64
      %s79 = sphi 0, %s65
      %s83 = sphi 0, %s83
      %s85 = sphi 0, %s83
      %s86 = sphi 0, %s85
      %s100 = sphi 0, %s86
      %s106 = sphi 0, %s108
      %s109 = sphi 0, %s106
      %s110 = sphi 0, %s109
      %s126 = sphi 0, %s110
      %s132 = sphi 0, %s134
      %s135 = sphi 0, %s132
      %s136 = sphi 0, %s135
      %s152 = sphi 0, %s136
      %s158 = sphi 0, %s160
      %s161 = sphi 0, %s158
      %s162 = sphi 0, %s161
      %s178 = sphi 0, %s162
      %s182 = sphi 0, %s182
      %s184 = sphi 0, %s182
      %s185 = sphi 0, %s184
      %s199 = sphi 0, %s185
      %s205 = sphi 0, %s207
      %s208 = sphi 0, %s205
      %s209 = sphi 0, %s208
      %s225 = sphi 0, %s209
    $region4: #{prenorm_residual.1} parent=1 // loop_header_branch
      %19 = sbr.rel (%p17) target = $region8
    $region5: #{prenorm_residual.1} parent=1 // loop_body
      %s21 = ssub.s32 %s16, 1
      %s22 = ssub.s32 %s16, 2
      %s29 = sadd.s32 1, %s24
      %p30 = scmp.ge.s32.totalorder %s29, 1
      %s31 = scalar_select %p30, 0, %s29
      %s32 = sadd.s32 1, %s23
      %s33 = scalar_select %p30, %s32, %s23
      %p34 = scmp.ge.s32.totalorder %s33, 2
      %s35 = scalar_select %p34, 0, %s33
      %s36 = ssub.s32 %s23, %s35
      %p37 = scmp.eq.s32.totalorder %s36, 0
      %s39 = sadd.s32 %s38, 1
      %s40 = scalar_select %p37, %s38, %s39
      %p43 = pneg %p37
      %p44 = scmp.eq.s32.totalorder %s16, 1
      %p45 = por %p43, %p44
      %p46 = scmp.ne.s32.totalorder %s38, %s41
      %p47 = scmp.eq.s32.totalorder %s16, 0
      %p48 = por %p46, %p47
      %p49 = scmp.ne.s32.totalorder %s38, %s41
      %p50 = scmp.eq.s32.totalorder %s21, 1
      %p51 = por %p49, %p50
      %p52 = scmp.ne.s32.totalorder %s41, %s42
      %p53 = scmp.eq.s32.totalorder %s21, 0
      %p54 = por %p52, %p53
      %p55 = scmp.ne.s32.totalorder %s41, %s42
      %p56 = scmp.eq.s32.totalorder %s22, 1
      %p57 = por %p55, %p56
      %p59 = scmp.ne.s32.totalorder %s42, %s58
      %p60 = scmp.eq.s32.totalorder %s22, 0
      %p61 = por %p59, %p60
      %s63 = sadd.s32 %s62, 1
      %p66 = scmp.eq.s32.totalorder %s16, 1
      %p67 = scmp.ne.s32.totalorder %s62, %s64
      %p68 = scmp.eq.s32.totalorder %s16, 0
      %p69 = por %p67, %p68
      %p70 = scmp.ne.s32.totalorder %s62, %s64
      %p71 = scmp.eq.s32.totalorder %s21, 1
      %p72 = por %p70, %p71
      %p73 = scmp.ne.s32.totalorder %s64, %s65
      %p74 = scmp.eq.s32.totalorder %s21, 0
      %p75 = por %p73, %p74
      %p76 = scmp.ne.s32.totalorder %s64, %s65
      %p77 = scmp.eq.s32.totalorder %s22, 1
      %p78 = por %p76, %p77
      %p80 = scmp.ne.s32.totalorder %s65, %s79
      %p81 = scmp.eq.s32.totalorder %s22, 0
      %p82 = por %p80, %p81
      %s84 = sadd.s32 %s83, 1
      %p87 = scmp.eq.s32.totalorder %s16, 1
      %p88 = scmp.ne.s32.totalorder %s83, %s85
      %p89 = scmp.eq.s32.totalorder %s16, 0
      %p90 = por %p88, %p89
      %p91 = scmp.ne.s32.totalorder %s83, %s85
      %p92 = scmp.eq.s32.totalorder %s21, 1
      %p93 = por %p91, %p92
      %p94 = scmp.ne.s32.totalorder %s85, %s86
      %p95 = scmp.eq.s32.totalorder %s21, 0
      %p96 = por %p94, %p95
      %p97 = scmp.ne.s32.totalorder %s85, %s86
      %p98 = scmp.eq.s32.totalorder %s22, 1
      %p99 = por %p97, %p98
      %p101 = scmp.ne.s32.totalorder %s86, %s100
      %p102 = scmp.eq.s32.totalorder %s22, 0
      %p103 = por %p101, %p102
      %s104 = ssub.s32 %s24, %s31
      %p105 = scmp.eq.s32.totalorder %s104, 0
      %s107 = sadd.s32 %s106, 1
      %s108 = scalar_select %p105, %s106, %s107
      %p111 = pneg %p105
      %p112 = scmp.eq.s32.totalorder %s16, 1
      %p113 = por %p111, %p112
      %p114 = scmp.ne.s32.totalorder %s106, %s109
      %p115 = scmp.eq.s32.totalorder %s16, 0
      %p116 = por %p114, %p115
      %p117 = scmp.ne.s32.totalorder %s106, %s109
      %p118 = scmp.eq.s32.totalorder %s21, 1
      %p119 = por %p117, %p118
      %p120 = scmp.ne.s32.totalorder %s109, %s110
      %p121 = scmp.eq.s32.totalorder %s21, 0
      %p122 = por %p120, %p121
      %p123 = scmp.ne.s32.totalorder %s109, %s110
      %p124 = scmp.eq.s32.totalorder %s22, 1
      %p125 = por %p123, %p124
      %p127 = scmp.ne.s32.totalorder %s110, %s126
      %p128 = scmp.eq.s32.totalorder %s22, 0
      %p129 = por %p127, %p128
      %s130 = ssub.s32 %s24, %s31
      %p131 = scmp.eq.s32.totalorder %s130, 0
      %s133 = sadd.s32 %s132, 1
      %s134 = scalar_select %p131, %s132, %s133
      %p137 = pneg %p131
      %p138 = scmp.eq.s32.totalorder %s16, 1
      %p139 = por %p137, %p138
      %p140 = scmp.ne.s32.totalorder %s132, %s135
      %p141 = scmp.eq.s32.totalorder %s16, 0
      %p142 = por %p140, %p141
      %p143 = scmp.ne.s32.totalorder %s132, %s135
      %p144 = scmp.eq.s32.totalorder %s21, 1
      %p145 = por %p143, %p144
      %p146 = scmp.ne.s32.totalorder %s135, %s136
      %p147 = scmp.eq.s32.totalorder %s21, 0
      %p148 = por %p146, %p147
      %p149 = scmp.ne.s32.totalorder %s135, %s136
      %p150 = scmp.eq.s32.totalorder %s22, 1
      %p151 = por %p149, %p150
      %p153 = scmp.ne.s32.totalorder %s136, %s152
      %p154 = scmp.eq.s32.totalorder %s22, 0
      %p155 = por %p153, %p154
      %s156 = ssub.s32 %s24, %s31
      %p157 = scmp.eq.s32.totalorder %s156, 0
      %s159 = sadd.s32 %s158, 1
      %s160 = scalar_select %p157, %s158, %s159
      %p163 = pneg %p157
      %p164 = scmp.eq.s32.totalorder %s16, 1
      %p165 = por %p163, %p164
      %p166 = scmp.ne.s32.totalorder %s158, %s161
      %p167 = scmp.eq.s32.totalorder %s16, 0
      %p168 = por %p166, %p167
      %p169 = scmp.ne.s32.totalorder %s158, %s161
      %p170 = scmp.eq.s32.totalorder %s21, 1
      %p171 = por %p169, %p170
      %p172 = scmp.ne.s32.totalorder %s161, %s162
      %p173 = scmp.eq.s32.totalorder %s21, 0
      %p174 = por %p172, %p173
      %p175 = scmp.ne.s32.totalorder %s161, %s162
      %p176 = scmp.eq.s32.totalorder %s22, 1
      %p177 = por %p175, %p176
      %p179 = scmp.ne.s32.totalorder %s162, %s178
      %p180 = scmp.eq.s32.totalorder %s22, 0
      %p181 = por %p179, %p180
      %s183 = sadd.s32 %s182, 1
      %p186 = scmp.eq.s32.totalorder %s16, 1
      %p187 = scmp.ne.s32.totalorder %s182, %s184
      %p188 = scmp.eq.s32.totalorder %s16, 0
      %p189 = por %p187, %p188
      %p190 = scmp.ne.s32.totalorder %s182, %s184
      %p191 = scmp.eq.s32.totalorder %s21, 1
      %p192 = por %p190, %p191
      %p193 = scmp.ne.s32.totalorder %s184, %s185
      %p194 = scmp.eq.s32.totalorder %s21, 0
      %p195 = por %p193, %p194
      %p196 = scmp.ne.s32.totalorder %s184, %s185
      %p197 = scmp.eq.s32.totalorder %s22, 1
      %p198 = por %p196, %p197
      %p200 = scmp.ne.s32.totalorder %s185, %s199
      %p201 = scmp.eq.s32.totalorder %s22, 0
      %p202 = por %p200, %p201
      %s203 = ssub.s32 %s23, %s35
      %p204 = scmp.eq.s32.totalorder %s203, 0
      %s206 = sadd.s32 %s205, 1
      %s207 = scalar_select %p204, %s205, %s206
      %p210 = pneg %p204
      %p211 = scmp.eq.s32.totalorder %s16, 1
      %p212 = por %p210, %p211
      %p213 = scmp.ne.s32.totalorder %s205, %s208
      %p214 = scmp.eq.s32.totalorder %s16, 0
      %p215 = por %p213, %p214
      %p216 = scmp.ne.s32.totalorder %s205, %s208
      %p217 = scmp.eq.s32.totalorder %s21, 1
      %p218 = por %p216, %p217
      %p219 = scmp.ne.s32.totalorder %s208, %s209
      %p220 = scmp.eq.s32.totalorder %s21, 0
      %p221 = por %p219, %p220
      %p222 = scmp.ne.s32.totalorder %s208, %s209
      %p223 = scmp.eq.s32.totalorder %s22, 1
      %p224 = por %p222, %p223
      %p226 = scmp.ne.s32.totalorder %s209, %s225
      %p227 = scmp.eq.s32.totalorder %s22, 0
      %p228 = por %p226, %p227
      %p229 = scmp.le.s32.totalorder 1, %s16
      %p230 = scmp.lt.s32.totalorder %s16, 3
      %p231 = pnand %p229, %p230
      %p232 = pneg %p231
      // Predicated region
      $region9: #{prenorm_residual.1} parent=5 // pred_check
        _
      $region10: #{prenorm_residual.1} parent=5 // pred_check_branch
        %234 = sbr.rel (%p231) target = $region12
      $region11: #{prenorm_residual.1} parent=5 // pred_region
        %s235 = ssub.s32 %s16, 1
        // Predicated region
        $region13: #{prenorm_residual.1} parent=11 // pred_check
          %p236 = pneg %p75
        $region14: #{prenorm_residual.1} parent=11 // pred_check_branch
          %238 = sbr.rel (%p236) target = $region16
        $region15: #{prenorm_residual.1} parent=11 // pred_region
          _
        $region16: #{prenorm_residual.1} parent=11 // pred_fallthru
          _
        // Predicated region
        $region17: #{prenorm_residual.1} parent=11 // pred_check
          %p239 = pneg %p96
        $region18: #{prenorm_residual.1} parent=11 // pred_check_branch
          %241 = sbr.rel (%p239) target = $region20
        $region19: #{prenorm_residual.1} parent=11 // pred_region
          _
        $region20: #{prenorm_residual.1} parent=11 // pred_fallthru
          _
        // Predicated region
        $region21: #{prenorm_residual.1} parent=11 // pred_check
          %p242 = pneg %p122
        $region22: #{prenorm_residual.1} parent=11 // pred_check_branch
          %244 = sbr.rel (%p242) target = $region24
        $region23: #{prenorm_residual.1} parent=11 // pred_region
          %s245 = smul.u32 2, %s26
          %p246 = scmp.lt.s32.totalorder %s245, 1
          %s247 = scalar_select %p246, %s245, 1
          %s248 = smul.addr %s247, 4
          %s249 = scalar_lea.vmem %s3, %s248
          %s250 = smul.u32 2, %s26
        $region24: #{prenorm_residual.1} parent=11 // pred_fallthru
          _
        // Predicated region
        $region25: #{prenorm_residual.1} parent=11 // pred_check
          %p251 = pneg %p148
        $region26: #{prenorm_residual.1} parent=11 // pred_check_branch
          %253 = sbr.rel (%p251) target = $region28
        $region27: #{prenorm_residual.1} parent=11 // pred_region
          %s254 = smul.u32 2, %s26
          %p255 = scmp.lt.s32.totalorder %s254, 1
          %s256 = scalar_select %p255, %s254, 1
          %s257 = scalar_lea.vmem %s4, %s256
          %s258 = smul.u32 2, %s26
        $region28: #{prenorm_residual.1} parent=11 // pred_fallthru
          _
        // Predicated region
        $region29: #{prenorm_residual.1} parent=11 // pred_check
          %p259 = pneg %p174
        $region30: #{prenorm_residual.1} parent=11 // pred_check_branch
          %261 = sbr.rel (%p259) target = $region32
        $region31: #{prenorm_residual.1} parent=11 // pred_region
          %s262 = smul.u32 32, %s26
          %p263 = scmp.lt.s32.totalorder %s262, 31
          %s264 = scalar_select %p263, %s262, 31
          %s265 = smul.addr %s264, 4
          %s266 = scalar_lea.vmem %s5, %s265
          %s267 = smul.u32 32, %s26
        $region32: #{prenorm_residual.1} parent=11 // pred_fallthru
          _
        // Predicated region
        $region33: #{prenorm_residual.1} parent=11 // pred_check
          %p268 = pneg %p195
        $region34: #{prenorm_residual.1} parent=11 // pred_check_branch
          %270 = sbr.rel (%p268) target = $region36
        $region35: #{prenorm_residual.1} parent=11 // pred_region
          _
        $region36: #{prenorm_residual.1} parent=11 // pred_fallthru
          _
      $region12: #{prenorm_residual.1} parent=5 // pred_fallthru
        _
      %p271 = scmp.lt.s32.totalorder %s16, 2
      // Predicated region
      $region37: #{prenorm_residual.1} parent=5 // pred_check
        %p272 = pneg %p271
      $region38: #{prenorm_residual.1} parent=5 // pred_check_branch
        %274 = sbr.rel (%p272) target = $region40
      $region39: #{prenorm_residual.1} parent=5 // pred_region
        // Predicated region
        $region41: #{prenorm_residual.1} parent=39 // pred_check
          %p275 = pneg %p48
        $region42: #{prenorm_residual.1} parent=39 // pred_check_branch
          %277 = sbr.rel (%p275) target = $region44
        $region43: #{prenorm_residual.1} parent=39 // pred_region
          %p278 = scmp.lt.s32.totalorder %s23, 1
          %s279 = scalar_select %p278, %s23, 1
          %s280 = smul.addr %s279, 8
          %s281 = scalar_lea.vmem %s0, %s280
        $region44: #{prenorm_residual.1} parent=39 // pred_fallthru
          _
      $region40: #{prenorm_residual.1} parent=5 // pred_fallthru
        _
      %p282 = scmp.le.s32.totalorder 1, %s16
      %p283 = scmp.lt.s32.totalorder %s16, 3
      %p284 = pnand %p282, %p283
      %p285 = pneg %p284
      // Predicated region
      $region45: #{prenorm_residual.1} parent=5 // pred_check
        _
      $region46: #{prenorm_residual.1} parent=5 // pred_check_branch
        %287 = sbr.rel (%p284) target = $region48
      $region47: #{prenorm_residual.1} parent=5 // pred_region
        %s288 = ssub.s32 %s16, 1
        %p289 = scmp.lt.s32.totalorder %s25, 1
        %s290 = scalar_select %p289, %s25, 1
        %s291 = smul.addr %s290, 8
        %s292 = scalar_lea.vmem %s0, %s291
        %p293 = pneg %p54
        %p294 = pneg %p51
        %p295 = pneg %p75
        %p296 = pneg %p72
        %p297 = pneg %p96
        %p298 = pneg %p93
        %s299 = smul.u32 2, %s26
        %p300 = scmp.lt.s32.totalorder %s299, 1
        %s301 = scalar_select %p300, %s299, 1
        %s302 = smul.addr %s301, 4
        %s303 = scalar_lea.vmem %s3, %s302
        %p304 = pneg %p122
        %p305 = pneg %p119
        %s306 = smul.u32 2, %s26
        %p307 = scmp.lt.s32.totalorder %s306, 1
        %s308 = scalar_select %p307, %s306, 1
        %s309 = scalar_lea.vmem %s4, %s308
        %p310 = pneg %p148
        %p311 = pneg %p145
        %s312 = smul.u32 32, %s26
        %p313 = scmp.lt.s32.totalorder %s312, 31
        %s314 = scalar_select %p313, %s312, 31
        %s315 = smul.addr %s314, 4
        %s316 = scalar_lea.vmem %s5, %s315
        %p317 = pneg %p174
        %p318 = pneg %p171
        %p319 = pneg %p195
        %p320 = pneg %p192
        %p321 = pneg %p221
        %p322 = pneg %p218
        %s323 = sand.u32 %s208, 1
        %s324 = scalar_lea.sflag [#allocation5], %s323
        %s325 = sand.u32 %s208, 1
        %s326 = smul.addr %s325, 8
        %s327 = scalar_lea.vmem [#allocation4], %s326
        %p328 = scmp.lt.s32.totalorder %s25, 1
        %s329 = scalar_select %p328, %s25, 1
        %s330 = smul.addr %s329, 8
        %s331 = scalar_lea.vmem %s0, %s330
        %s332 = smul.u32 2, %s26
        %p333 = scmp.lt.s32.totalorder %s332, 1
        %s334 = scalar_select %p333, %s332, 1
        %s335 = smul.addr %s334, 4
        %s336 = scalar_lea.vmem %s3, %s335
        %s337 = smul.u32 2, %s26
        %s338 = smul.u32 2, %s26
        %p339 = scmp.lt.s32.totalorder %s338, 1
        %s340 = scalar_select %p339, %s338, 1
        %s341 = scalar_lea.vmem %s4, %s340
        %s342 = smul.u32 2, %s26
        %s343 = smul.u32 32, %s26
        %p344 = scmp.lt.s32.totalorder %s343, 31
        %s345 = scalar_select %p344, %s343, 31
        %s346 = smul.addr %s345, 4
        %s347 = scalar_lea.vmem %s5, %s346
        %s348 = smul.u32 32, %s26
        %p350 = scmp.eq.s32.totalorder %s26, 0
        // Predicated region
        $region49: #{prenorm_residual.1} parent=47 // pred_check
          %p351 = pneg %p350
        $region50: #{prenorm_residual.1} parent=47 // pred_check_branch
          %353 = sbr.rel (%p351) target = $region52
        $region51: #{prenorm_residual.1} parent=47 // pred_region
          %v354 = vld [vmem:[%s331] sm:$0xff]
          %355 = vadd.xlane.f32.xlu0 %v354
          %v356 = vpop.xlane.xlu0 %355
          %v357 = vmul.f32 %v356, 0.0078125
          %v358 = vmul.f32 %v354, %v354
          %359 = vadd.xlane.f32.xlu0 %v358
          %v360 = vpop.xlane.xlu0 %359
          %v361 = vmul.f32 %v360, 0.0078125
          %v362 = vmul.f32 %v357, %v357
          %v363 = vsub.f32 %v361, %v362
          %v364 = vmax.f32 %v363, 0.0
          %v365 = vsub.f32 %v354, %v357
          %v366 = vadd.f32 %v364, 1e-05
          %v367 = vrsqrt.pop %v366
          %v368 = vmul.f32 %v365, %v367
          %v369 = vld [vmem:[%s1] sm:$0x1]
          %v371 = vlaneseq
          %v372 = vshrl.u32 %v371, 7
          %v373 = vsub.s32 0, %v372
          %v374 = vrot.slane %v369, %v373
          %v376 = vmul.f32 %v368, %v374
          %v377 = vld [vmem:[%s2] sm:$0x1]
          %v379 = vlaneseq
          %v380 = vshrl.u32 %v379, 7
          %v381 = vsub.s32 0, %v380
          %v382 = vrot.slane %v377, %v381
          %v384 = vadd.f32 %v376, %v382
          %v385 = vpack.c.bf16 %v384, %v384
          %386 = vst [vmem:[#allocation2] sm:$0xf] %v385
          %387 = vst [vmem:[#allocation3] sm:$0xff] 0.0
        $region52: #{prenorm_residual.1} parent=47 // pred_fallthru
          _
        %v388 = vld [vmem:[#allocation2] sm:$0xf]
        %v389 = vld [vmem:[%s336] sm:$0xff]
        %v390 = vld [vmem:[%s336 + $0x8] sm:$0xff]
        %v391 = vld [vmem:[%s336 + $0x10] sm:$0xff]
        %v392 = vld [vmem:[%s336 + $0x18] sm:$0xff]
        %v393 = vld [vmem:[%s336 + $0x20] sm:$0xff]
        %v394 = vld [vmem:[%s336 + $0x28] sm:$0xff]
        %v395 = vld [vmem:[%s336 + $0x30] sm:$0xff]
        %v396 = vld [vmem:[%s336 + $0x38] sm:$0xff]
        %v397 = vld [vmem:[%s336 + $0x40] sm:$0xff]
        %v398 = vld [vmem:[%s336 + $0x48] sm:$0xff]
        %v399 = vld [vmem:[%s336 + $0x50] sm:$0xff]
        %v400 = vld [vmem:[%s336 + $0x58] sm:$0xff]
        %v401 = vld [vmem:[%s336 + $0x60] sm:$0xff]
        %v402 = vld [vmem:[%s336 + $0x68] sm:$0xff]
        %v403 = vld [vmem:[%s336 + $0x70] sm:$0xff]
        %v404 = vld [vmem:[%s336 + $0x78] sm:$0xff]
        %v405 = vld [vmem:[%s341] sm:$0x3]
        %v407 = vlaneseq
        %v408 = vshrl.u32 %v407, 7
        %v409 = vsub.s32 0, %v408
        %v410 = vrot.slane %v405, %v409
        %v411 = vlaneseq
        %v412 = vshrl.u32 %v411, 7
        %v413 = vsub.s32 1, %v412
        %v414 = vrot.slane %v405, %v413
        %v433 = vunpack.c.l.b16 %v389
        %v434 = vunpack.c.h.b16 %v389
        %v435 = vunpack.c.l.b16 %v390
        %v436 = vunpack.c.h.b16 %v390
        %v437 = vunpack.c.l.b16 %v391
        %v438 = vunpack.c.h.b16 %v391
        %v439 = vunpack.c.l.b16 %v392
        %v440 = vunpack.c.h.b16 %v392
        %v441 = vunpack.c.l.b16 %v393
        %v442 = vunpack.c.h.b16 %v393
        %v443 = vunpack.c.l.b16 %v394
        %v444 = vunpack.c.h.b16 %v394
        %v445 = vunpack.c.l.b16 %v395
        %v446 = vunpack.c.h.b16 %v395
        %v447 = vunpack.c.l.b16 %v396
        %v448 = vunpack.c.h.b16 %v396
        %v449 = vunpack.c.l.b16 %v397
        %v450 = vunpack.c.h.b16 %v397
        %v451 = vunpack.c.l.b16 %v398
        %v452 = vunpack.c.h.b16 %v398
        %v453 = vunpack.c.l.b16 %v399
        %v454 = vunpack.c.h.b16 %v399
        %v455 = vunpack.c.l.b16 %v400
        %v456 = vunpack.c.h.b16 %v400
        %v457 = vunpack.c.l.b16 %v401
        %v458 = vunpack.c.h.b16 %v401
        %v459 = vunpack.c.l.b16 %v402
        %v460 = vunpack.c.h.b16 %v402
        %v461 = vunpack.c.l.b16 %v403
        %v462 = vunpack.c.h.b16 %v403
        %v463 = vunpack.c.l.b16 %v404
        %v464 = vunpack.c.h.b16 %v404
        %v465 = vpack.c.b16 %v435, %v433
        %v466 = vpack.c.b16 %v436, %v434
        %v467 = vpack.c.b16 %v439, %v437
        %v468 = vpack.c.b16 %v440, %v438
        %v469 = vpack.c.b16 %v443, %v441
        %v470 = vpack.c.b16 %v444, %v442
        %v471 = vpack.c.b16 %v447, %v445
        %v472 = vpack.c.b16 %v448, %v446
        %v473 = vpack.c.b16 %v451, %v449
        %v474 = vpack.c.b16 %v452, %v450
        %v475 = vpack.c.b16 %v455, %v453
        %v476 = vpack.c.b16 %v456, %v454
        %v477 = vpack.c.b16 %v459, %v457
        %v478 = vpack.c.b16 %v460, %v458
        %v479 = vpack.c.b16 %v463, %v461
        %v480 = vpack.c.b16 %v464, %v462
        %497 = vmatprep.subr.bf16.mxu0 %v466
        %498 = vmatpush1.bf16.msra.mxu0 %v465
        %499 = vmatprep.subr.bf16.mxu0 %v468
        %500 = vmatpush1.bf16.msra.mxu0 %v467
        %501 = vmatprep.subr.bf16.mxu0 %v470
        %502 = vmatpush1.bf16.msra.mxu0 %v469
        %503 = vmatprep.subr.bf16.mxu0 %v472
        %504 = vmatpush1.bf16.msra.mxu0 %v471
        %505 = vmatprep.subr.bf16.mxu0 %v474
        %506 = vmatpush1.bf16.msra.mxu0 %v473
        %507 = vmatprep.subr.bf16.mxu0 %v476
        %508 = vmatpush1.bf16.msra.mxu0 %v475
        %509 = vmatprep.subr.bf16.mxu0 %v478
        %510 = vmatpush1.bf16.msra.mxu0 %v477
        %511 = vmatprep.subr.bf16.mxu0 %v480
        %512 = vmatpush1.bf16.msra.mxu0 %v479
        %513 = vmatprep.subr.bf16.mxu0 0
        %514 = vmatpush1.bf16.msra.mxu0 0
        %515 = vmatprep.subr.bf16.mxu0 0
        %516 = vmatpush1.bf16.msra.mxu0 0
        %517 = vmatprep.subr.bf16.mxu0 0
        %518 = vmatpush1.bf16.msra.mxu0 0
        %519 = vmatprep.subr.bf16.mxu0 0
        %520 = vmatpush1.bf16.msra.mxu0 0
        %521 = vmatprep.subr.bf16.mxu0 0
        %522 = vmatpush1.bf16.msra.mxu0 0
        %523 = vmatprep.subr.bf16.mxu0 0
        %524 = vmatpush1.bf16.msra.mxu0 0
        %525 = vmatprep.subr.bf16.mxu0 0
        %526 = vmatpush1.bf16.msra.mxu0 0
        %527 = vmatprep.subr.bf16.mxu0 0
        %528 = vmatpush1.bf16.msra.mxu0 0
        %529 = vmatprep.mubr.bf16.mxu0 0
        %530 = vmatmul.mubr.bf16.gmra.mrb[0].mxu0 %v388
        %v531 = vpop.f32.mrb[0].mxu0
        %v532 = vadd.f32 %v410, %v531
        %v533 = vpop.f32.mrb[0].mxu0
        %v534 = vadd.f32 %v414, %v533
        %v535 = vpop.f32.mrb[0].mxu0
        %v536 = vpop.f32.mrb[0].mxu0
        %537 = vdwg.mxu0
        %v538 = vmul.f32 %v532, 0.5
        %v539 = vmul.f32 %v534, 0.5
        %v540 = vmul.f32 %v532, 0.70710677
        %v541 = vmul.f32 %v534, 0.70710677
        %v542 = verf.f32.pop %v540
        %v543 = verf.f32.pop %v541
        %v544 = vadd.f32 %v542, 1.0
        %v545 = vadd.f32 %v543, 1.0
        %v546 = vmul.f32 %v538, %v544
        %v547 = vmul.f32 %v539, %v545
        %v548 = vld [vmem:[#allocation3] sm:$0xff]
        %v549 = vpack.c.bf16 %v546, %v546
        %v550 = vpack.c.bf16 %v547, %v547
        %v551 = vld [vmem:[%s347] sm:$0xf]
        %v552 = vld [vmem:[%s347 + $0x4] sm:$0xf]
        %v553 = vld [vmem:[%s347 + $0x8] sm:$0xf]
        %v554 = vld [vmem:[%s347 + $0xc] sm:$0xf]
        %v555 = vld [vmem:[%s347 + $0x10] sm:$0xf]
        %v556 = vld [vmem:[%s347 + $0x14] sm:$0xf]
        %v557 = vld [vmem:[%s347 + $0x18] sm:$0xf]
        %v558 = vld [vmem:[%s347 + $0x1c] sm:$0xf]
        %v559 = vld [vmem:[%s347 + $0x20] sm:$0xf]
        %v560 = vld [vmem:[%s347 + $0x24] sm:$0xf]
        %v561 = vld [vmem:[%s347 + $0x28] sm:$0xf]
        %v562 = vld [vmem:[%s347 + $0x2c] sm:$0xf]
        %v563 = vld [vmem:[%s347 + $0x30] sm:$0xf]
        %v564 = vld [vmem:[%s347 + $0x34] sm:$0xf]
        %v565 = vld [vmem:[%s347 + $0x38] sm:$0xf]
        %v566 = vld [vmem:[%s347 + $0x3c] sm:$0xf]
        %v567 = vld [vmem:[%s347 + $0x40] sm:$0xf]
        %v568 = vld [vmem:[%s347 + $0x44] sm:$0xf]
        %v569 = vld [vmem:[%s347 + $0x48] sm:$0xf]
        %v570 = vld [vmem:[%s347 + $0x4c] sm:$0xf]
        %v571 = vld [vmem:[%s347 + $0x50] sm:$0xf]
        %v572 = vld [vmem:[%s347 + $0x54] sm:$0xf]
        %v573 = vld [vmem:[%s347 + $0x58] sm:$0xf]
        %v574 = vld [vmem:[%s347 + $0x5c] sm:$0xf]
        %v575 = vld [vmem:[%s347 + $0x60] sm:$0xf]
        %v576 = vld [vmem:[%s347 + $0x64] sm:$0xf]
        %v577 = vld [vmem:[%s347 + $0x68] sm:$0xf]
        %v578 = vld [vmem:[%s347 + $0x6c] sm:$0xf]
        %v579 = vld [vmem:[%s347 + $0x70] sm:$0xf]
        %v580 = vld [vmem:[%s347 + $0x74] sm:$0xf]
        %v581 = vld [vmem:[%s347 + $0x78] sm:$0xf]
        %v582 = vld [vmem:[%s347 + $0x7c] sm:$0xf]
        %v615 = vunpack.c.l.b16 %v551
        %v616 = vunpack.c.l.b16 %v552
        %v617 = vunpack.c.l.b16 %v553
        %v618 = vunpack.c.l.b16 %v554
        %v619 = vunpack.c.l.b16 %v555
        %v620 = vunpack.c.l.b16 %v556
        %v621 = vunpack.c.l.b16 %v557
        %v622 = vunpack.c.l.b16 %v558
        %v623 = vunpack.c.l.b16 %v559
        %v624 = vunpack.c.l.b16 %v560
        %v625 = vunpack.c.l.b16 %v561
        %v626 = vunpack.c.l.b16 %v562
        %v627 = vunpack.c.l.b16 %v563
        %v628 = vunpack.c.l.b16 %v564
        %v629 = vunpack.c.l.b16 %v565
        %v630 = vunpack.c.l.b16 %v566
        %v631 = vunpack.c.l.b16 %v567
        %v632 = vunpack.c.l.b16 %v568
        %v633 = vunpack.c.l.b16 %v569
        %v634 = vunpack.c.l.b16 %v570
        %v635 = vunpack.c.l.b16 %v571
        %v636 = vunpack.c.l.b16 %v572
        %v637 = vunpack.c.l.b16 %v573
        %v638 = vunpack.c.l.b16 %v574
        %v639 = vunpack.c.l.b16 %v575
        %v640 = vunpack.c.l.b16 %v576
        %v641 = vunpack.c.l.b16 %v577
        %v642 = vunpack.c.l.b16 %v578
        %v643 = vunpack.c.l.b16 %v579
        %v644 = vunpack.c.l.b16 %v580
        %v645 = vunpack.c.l.b16 %v581
        %v646 = vunpack.c.l.b16 %v582
        %v647 = vpack.c.b16 %v616, %v615
        %v648 = vpack.c.b16 %v618, %v617
        %v649 = vpack.c.b16 %v620, %v619
        %v650 = vpack.c.b16 %v622, %v621
        %v651 = vpack.c.b16 %v624, %v623
        %v652 = vpack.c.b16 %v626, %v625
        %v653 = vpack.c.b16 %v628, %v627
        %v654 = vpack.c.b16 %v630, %v629
        %v655 = vpack.c.b16 %v632, %v631
        %v656 = vpack.c.b16 %v634, %v633
        %v657 = vpack.c.b16 %v636, %v635
        %v658 = vpack.c.b16 %v638, %v637
        %v659 = vpack.c.b16 %v640, %v639
        %v660 = vpack.c.b16 %v642, %v641
        %v661 = vpack.c.b16 %v644, %v643
        %v662 = vpack.c.b16 %v646, %v645
        %679 = vmatprep.subr.bf16.mxu0 0
        %680 = vmatpush1.bf16.msra.mxu0 %v647
        %681 = vmatprep.subr.bf16.mxu0 0
        %682 = vmatpush1.bf16.msra.mxu0 %v648
        %683 = vmatprep.subr.bf16.mxu0 0
        %684 = vmatpush1.bf16.msra.mxu0 %v649
        %685 = vmatprep.subr.bf16.mxu0 0
        %686 = vmatpush1.bf16.msra.mxu0 %v650
        %687 = vmatprep.subr.bf16.mxu0 0
        %688 = vmatpush1.bf16.msra.mxu0 %v651
        %689 = vmatprep.subr.bf16.mxu0 0
        %690 = vmatpush1.bf16.msra.mxu0 %v652
        %691 = vmatprep.subr.bf16.mxu0 0
        %692 = vmatpush1.bf16.msra.mxu0 %v653
        %693 = vmatprep.subr.bf16.mxu0 0
        %694 = vmatpush1.bf16.msra.mxu0 %v654
        %695 = vmatprep.subr.bf16.mxu0 0
        %696 = vmatpush1.bf16.msra.mxu0 %v655
        %697 = vmatprep.subr.bf16.mxu0 0
        %698 = vmatpush1.bf16.msra.mxu0 %v656
        %699 = vmatprep.subr.bf16.mxu0 0
        %700 = vmatpush1.bf16.msra.mxu0 %v657
        %701 = vmatprep.subr.bf16.mxu0 0
        %702 = vmatpush1.bf16.msra.mxu0 %v658
        %703 = vmatprep.subr.bf16.mxu0 0
        %704 = vmatpush1.bf16.msra.mxu0 %v659
        %705 = vmatprep.subr.bf16.mxu0 0
        %706 = vmatpush1.bf16.msra.mxu0 %v660
        %707 = vmatprep.subr.bf16.mxu0 0
        %708 = vmatpush1.bf16.msra.mxu0 %v661
        %709 = vmatprep.subr.bf16.mxu0 0
        %710 = vmatpush1.bf16.msra.mxu0 %v662
        %711 = vmatprep.mubr.bf16.mxu0 %v550
        %712 = vmatmul.mubr.bf16.gmra.mrb[0].mxu0 %v549
        %v713 = vpop.f32.mrb[0].mxu0
        %v714 = vadd.f32 0.0, %v713
        %v715 = vpop.f32.mrb[0].mxu0
        %v716 = vpop.f32.mrb[0].mxu0
        %v717 = vpop.f32.mrb[0].mxu0
        %718 = vdwg.mxu0
        %v719 = vadd.f32 %v548, %v714
        %720 = vst [vmem:[#allocation3] sm:$0xff] %v719
        // Predicated region
        $region53: #{prenorm_residual.1} parent=47 // pred_check
          %p721 = pneg %p350
        $region54: #{prenorm_residual.1} parent=47 // pred_check_branch
          %723 = sbr.rel (%p721) target = $region56
        $region55: #{prenorm_residual.1} parent=47 // pred_region
          %v724 = vld [vmem:[#allocation3] sm:$0xff]
          %v725 = vld [vmem:[%s6] sm:$0x1]
          %v727 = vlaneseq
          %v728 = vshrl.u32 %v727, 7
          %v729 = vsub.s32 0, %v728
          %v730 = vrot.slane %v725, %v729
          %v732 = vadd.f32 %v724, %v730
          %v733 = vld [vmem:[%s331] sm:$0xff]
          %v734 = vadd.f32 %v732, %v733
          %735 = vst [vmem:[%s327] sm:$0xff] %v734
        $region56: #{prenorm_residual.1} parent=47 // pred_fallthru
          _
        %s736 = sand.u32 %s208, 1
        %s737 = scalar_lea.sflag [#allocation5], %s736
        %s738 = sand.u32 %s208, 1
        %s739 = smul.addr %s738, 8
        %s740 = scalar_lea.vmem [#allocation4], %s739
        // Predicated region
        $region57: #{prenorm_residual.1} parent=47 // pred_check
          %p741 = pneg %p218
        $region58: #{prenorm_residual.1} parent=47 // pred_check_branch
          %743 = sbr.rel (%p741) target = $region60
        $region59: #{prenorm_residual.1} parent=47 // pred_region
          %s745 = ssub.s32 128, 128
          %746 = vsyncadd %s737, %s745
          %s747 = smul.addr %s25, 128
          %s748 = scalar_lea.hbm %s7, %s747
          %s750 = sshll.u32 %s740, 4
          %s751 = int_to_ptr.vmem [resolvable:$true] %s750
          %753 = dma.vmem_to_hbm [thread:$0]  %s751, 128, %s748, %s737
        $region60: #{prenorm_residual.1} parent=47 // pred_fallthru
          _
      $region48: #{prenorm_residual.1} parent=5 // pred_fallthru
        _
      %p754 = scmp.le.s32.totalorder 2, %s16
      // Predicated region
      $region61: #{prenorm_residual.1} parent=5 // pred_check
        %p755 = pneg %p754
      $region62: #{prenorm_residual.1} parent=5 // pred_check_branch
        %757 = sbr.rel (%p755) target = $region64
      $region63: #{prenorm_residual.1} parent=5 // pred_region
        %s758 = ssub.s32 %s16, 2
        // Predicated region
        $region65: #{prenorm_residual.1} parent=63 // pred_check
          %p759 = pneg %p224
        $region66: #{prenorm_residual.1} parent=63 // pred_check_branch
          %761 = sbr.rel (%p759) target = $region68
        $region67: #{prenorm_residual.1} parent=63 // pred_region
          %s762 = sand.u32 %s209, 1
          %s763 = scalar_lea.sflag [#allocation5], %s762
          %s764 = sand.u32 %s209, 1
          %s765 = smul.addr %s764, 8
          %s766 = scalar_lea.vmem [#allocation4], %s765
          %767 = dma.done %s763, 128
        $region68: #{prenorm_residual.1} parent=63 // pred_fallthru
          _
      $region64: #{prenorm_residual.1} parent=5 // pred_fallthru
        _
    $region6: #{prenorm_residual.1} parent=1 // loop_footer
      %s20 = sadd.s32 1, %s16
    $region7: #{prenorm_residual.1} parent=1 // loop_footer_branch
      %15 = sbr.rel target = $region3
    $region8: #{prenorm_residual.1} parent=1 // loop_exit
      _
    %768 = vsyncpa [#allocation5], 1
    %s769 = scalar_lea.sflag [#allocation5], 1
    %770 = vsyncpa %s769, 1

</llo_original>
